<compile_context>
chip_gen: v6e
topology: v6e:2x2x1
jax: 0.10.0
libtpu: 0.0.40
codegen_flags: <defaults>
</compile_context>

<pallas_src>
import jax
import jax.numpy as jnp
from jax.experimental import pallas as pl
from jax.experimental.pallas import tpu as pltpu


def _choose_layout(total, b, row):
    """Pick a lane-dense (R, W) factorization of `total` elements.

    W is the largest multiple of 128 (<= 8192) that divides `total`, so the
    DMA moves full 128-lane rows. 61 is odd, so the logical row width is
    rarely lane-aligned — searching all multiple-of-128 divisors (not just
    powers of two) lets many more shapes hit the dense path. Falls back to
    the logical (b, 61*in_dim) layout otherwise (correct, just less dense).
    """
    w = (min(total, 8192) // 128) * 128
    while w >= 128:
        if total % w == 0:
            return total // w, w
        w -= 128
    return b, row


def _chunk_plan(R, W, itemsize, max_inflight=4, min_chunk_bytes=512 * 1024):
    """Split the (R, W) slab into up to `max_inflight` row chunks.

    Several independent HBM->HBM DMAs in flight saturate HBM bandwidth on
    large copies; small copies (< ~512 KiB) stay a single DMA.
    Returns a static list of (row_start, row_count).
    """
    total_bytes = R * W * itemsize
    n_by_bytes = -(-total_bytes // min_chunk_bytes)  # ceil div
    n = max(1, min(max_inflight, R, n_by_bytes))
    chunk = -(-R // n)  # ceil div
    chunks = []
    start = 0
    while start < R:
        size = min(chunk, R - start)
        chunks.append((start, size))
        start += size
    return chunks


def _make_hbm_copy_kernel(chunks):
    """Kernel: chunked direct HBM->HBM DMA copy (no VMEM bounce).

    `chunks` is a static Python list of (row_start, row_count); all chunk
    DMAs are issued back-to-back (kept in flight together) and then drained.
    """

    def kernel(x_hbm, o_hbm, sems):
        for i, (start, size) in enumerate(chunks):
            pltpu.make_async_copy(
                x_hbm.at[pl.ds(start, size)],
                o_hbm.at[pl.ds(start, size)],
                sems.at[i],
            ).start()
        for i, (start, size) in enumerate(chunks):
            pltpu.make_async_copy(
                x_hbm.at[pl.ds(start, size)],
                o_hbm.at[pl.ds(start, size)],
                sems.at[i],
            ).wait()

    return kernel


def concatenate_forward(x, in_dim, *, materialize=False):
    """Equivalent of Concatenate(in_dim).forward(x) for a contiguous input.

    Default (materialize=False): metadata-only reshape — `view(-1, 61*in_dim)`
    moves zero bytes, so no kernel can beat it; this is the faithful and
    fastest implementation on v5e/v6e/v7x.

    materialize=True: force a fresh output buffer, produced by a Pallas
    kernel doing chunked HBM->HBM DMA (DMA-engine copy at HBM roofline).
    """
    row = 61 * in_dim
    total = x.size
    assert total % row == 0, "input size must be divisible by 61*in_dim"
    b = total // row

    if not materialize:
        # Zero-copy path: contiguous reshape is metadata only.
        return x.reshape(b, row)

    # Lane-dense slab for the DMA copy; contiguous reshape is metadata-only.
    R, W = _choose_layout(total, b, row)
    x2 = x.reshape(R, W)
    chunks = _chunk_plan(R, W, x.dtype.itemsize)

    out_flat = pl.pallas_call(
        _make_hbm_copy_kernel(chunks),
        out_shape=jax.ShapeDtypeStruct((R, W), x.dtype),
        in_specs=[pl.BlockSpec(memory_space=pl.ANY)],   # raw HBM ref, no auto-DMA
        out_specs=pl.BlockSpec(memory_space=pl.ANY),    # raw HBM ref, no auto-DMA
        scratch_shapes=[pltpu.SemaphoreType.DMA((len(chunks),))],
    )(x2)

    # Back to the logical view shape; again a free contiguous reshape.
    return out_flat.reshape(b, row)


if __name__ == "__main__":
    key = jax.random.PRNGKey(0)

    # Case 1: module-spec shape (batch=2, in_dim=4), zero-copy reshape path.
    in_dim, batch = 4, 2
    x = jax.random.normal(key, (batch, 61, in_dim), dtype=jnp.float32)
    ref = x.reshape(-1, 61 * in_dim)
    out = jax.block_until_ready(concatenate_forward(x, in_dim))
    assert out.shape == (batch, 61 * in_dim), out.shape
    assert bool(jnp.array_equal(out, ref)), "mismatch vs reference (case 1)"

    # Case 1b: same input through the materialized Pallas HBM->HBM DMA kernel
    # (single-chunk path, falls back to the logical (2, 244) layout).
    out_k = jax.block_until_ready(concatenate_forward(x, in_dim, materialize=True))
    assert out_k.shape == (batch, 61 * in_dim), out_k.shape
    assert bool(jnp.array_equal(out_k, ref)), "mismatch vs reference (case 1b)"

    # Case 2: lane-dense layout (W = 7808 = 61*128) + multi-chunk DMA path.
    in_dim2, batch2 = 64, 64
    x2 = jax.random.normal(key, (batch2, 61, in_dim2), dtype=jnp.float32)
    ref2 = x2.reshape(-1, 61 * in_dim2)
    out2 = jax.block_until_ready(concatenate_forward(x2, in_dim2, materialize=True))
    assert out2.shape == (batch2, 61 * in_dim2), out2.shape
    assert bool(jnp.array_equal(out2, ref2)), "mismatch vs reference (case 2)"

    print("KERNEL_OK")
</pallas_src>

<mosaic_0001>
module attributes {stable_mosaic.version = 11 : i64} {
  func.func @kernel(%arg0: memref<2x244xf32, #tpu.memory_space<any>>, %arg1: memref<2x244xf32, #tpu.memory_space<any>>, %arg2: memref<1x!tpu.dma_semaphore, #tpu.memory_space<semaphore_mem>>) attributes {dimension_semantics = [], scalar_prefetch = 0 : i64, scratch_operands = 1 : i64, tpu.core_type = #tpu.core_type<tc>} {
    %c0_i32 = arith.constant 0 : i32
    %c0_i32_0 = arith.constant 0 : i32
    %c0_i32_1 = arith.constant 0 : i32
    %0 = tpu.memref_slice %arg0[%c0_i32_0, %c0_i32_1] : memref<2x244xf32, #tpu.memory_space<any>> -> memref<2x244xf32, #tpu.memory_space<any>>
    %c0_i32_2 = arith.constant 0 : i32
    %c0_i32_3 = arith.constant 0 : i32
    %1 = tpu.memref_slice %arg1[%c0_i32_2, %c0_i32_3] : memref<2x244xf32, #tpu.memory_space<any>> -> memref<2x244xf32, #tpu.memory_space<any>>
    %2 = tpu.memref_slice %arg2[%c0_i32] : memref<1x!tpu.dma_semaphore, #tpu.memory_space<semaphore_mem>> -> memref<1x!tpu.dma_semaphore, #tpu.memory_space<semaphore_mem>>
    %3 = tpu.memref_squeeze %2 : memref<1x!tpu.dma_semaphore, #tpu.memory_space<semaphore_mem>> -> memref<!tpu.dma_semaphore, #tpu.memory_space<semaphore_mem>>
    tpu.enqueue_dma source(%0 : memref<2x244xf32, #tpu.memory_space<any>>) target(%1 : memref<2x244xf32, #tpu.memory_space<any>>) target_semaphore(%3 : memref<!tpu.dma_semaphore, #tpu.memory_space<semaphore_mem>>)
    %c0_i32_4 = arith.constant 0 : i32
    %c0_i32_5 = arith.constant 0 : i32
    %c0_i32_6 = arith.constant 0 : i32
    %4 = tpu.memref_slice %arg0[%c0_i32_5, %c0_i32_6] : memref<2x244xf32, #tpu.memory_space<any>> -> memref<2x244xf32, #tpu.memory_space<any>>
    %c0_i32_7 = arith.constant 0 : i32
    %c0_i32_8 = arith.constant 0 : i32
    %5 = tpu.memref_slice %arg1[%c0_i32_7, %c0_i32_8] : memref<2x244xf32, #tpu.memory_space<any>> -> memref<2x244xf32, #tpu.memory_space<any>>
    %6 = tpu.memref_slice %arg2[%c0_i32_4] : memref<1x!tpu.dma_semaphore, #tpu.memory_space<semaphore_mem>> -> memref<1x!tpu.dma_semaphore, #tpu.memory_space<semaphore_mem>>
    %7 = tpu.memref_squeeze %6 : memref<1x!tpu.dma_semaphore, #tpu.memory_space<semaphore_mem>> -> memref<!tpu.dma_semaphore, #tpu.memory_space<semaphore_mem>>
    tpu.wait_dma2 semaphore(%7 : memref<!tpu.dma_semaphore, #tpu.memory_space<semaphore_mem>>) src(%4 : memref<2x244xf32, #tpu.memory_space<any>>) dst(%5 : memref<2x244xf32, #tpu.memory_space<any>>)
    return
  }
}

</mosaic_0001>

<llo_original>
// kernel: tpu_custom_call.1
$region0: #{tpu_custom_call.1}
  #allocation0 [shape = 'u32[]', space=smem, size = 0x4, offset = 0x4, fixed_abs, tag = 'smem constant byte address 0x4 - core index']
  #allocation1 [shape = 'u32[144,128]{1,0:T(1,128)}', space=vmem, size = 0x12000, scoped, tag = 'internal scratch']
  #allocation2 [shape = 's32[1]{0}', space=sflag, size = 0x4, scoped, tag = 'scratch operand']
  #allocation3 [shape = 's32[]', space=sflag, size = 0x4, offset = 0, fixed_abs, tag = 'sflag constant byte address 0x0 - dummy sync flag']
  #allocation4 [shape = 'u32[0]{0}', space=smem, size = 0, offset = 0, fixed_abs, tag = 'smem constant byte address 0x0 - null']
  %s0 = inlined_call_operand.hbm [shape: f32[2,244], index: 0, kind: input, shape index: {}]
  %s1 = inlined_call_operand.hbm [shape: f32[2,244], index: 1, kind: output, shape index: {}]
  %s2 = sld [smem:[#allocation0]]
  $region2: #{tpu_custom_call.1} parent=0
    _
  %s4 = ssub.s32 1, %s2
  %s5 = scalar_select 0, %s4, %s2
  %s7 = sshll.u32 1, 14
  %s8 = sxor.u32 4294967295, %s7
  %12 = dma.general %s0, 64, %s1, [#allocation2], 131072, [#allocation4], 0, 0
  %s13 = smul.u32 2, 1
  %s14 = smul.u32 %s13, 2
  %s15 = sshll.u32 %s14, 4
  %16 = dma.done [#allocation2], %s15
  %17 = vsyncmov [#allocation2]
  %s18 = vpop.sfrf %17
  %p19 = scmp.eq.s32.totalorder %s18, 0
  %p20 = pneg %p19
  %22 = shalt.err (%p20)

</llo_original>
